<compile_context>
chip_gen: v7x
topology: tpu7x:2x2x1
jax: 0.10.0
libtpu: 0.0.40
codegen_flags: <defaults>
</compile_context>

<pallas_src>
import functools

import jax
import jax.numpy as jnp
from jax.experimental import pallas as pl
from jax.experimental.pallas import tpu as pltpu


def _round_up(x, m):
    return ((x + m - 1) // m) * m


def _crossnet_kernel(x_ref, w_ref, b_ref, o_ref, *, layer_num):
    """One batch tile of the full CrossNet forward.

    x_ref: (TB, Dp)  input tile
    w_ref: (L,  Dp)  per-layer cross weights (squeezed from (D, 1)), zero-padded
    b_ref: (L,  Dp)  per-layer biases, zero-padded
    o_ref: (TB, Dp)  output tile
    """
    x0 = x_ref[...]
    if x0.dtype != jnp.float32:
        x0 = x0.astype(jnp.float32)

    def layer(w, b, xl):
        # (x_l @ kernels[i]) with kernels[i] of shape (D, 1) == per-row dot.
        # VPU multiply + XLU lane-reduce.
        row_dot = jnp.sum(xl * w[None, :], axis=-1, keepdims=True)   # (TB, 1)
        return x0 * row_dot + b[None, :] + xl                        # (TB, Dp)

    if layer_num <= 8:
        # Small / typical L: unroll at trace time (static sublane indices,
        # full LLO scheduler visibility across layers).
        xl = x0
        for i in range(layer_num):
            xl = layer(w_ref[i, :].astype(jnp.float32),
                       b_ref[i, :].astype(jnp.float32),
                       xl)
    else:
        # Large L: bound live ranges / code size with a carried loop.
        def body(i, xl):
            return layer(w_ref[i, :].astype(jnp.float32),
                         b_ref[i, :].astype(jnp.float32),
                         xl)
        xl = jax.lax.fori_loop(0, layer_num, body, x0)

    o_ref[...] = xl.astype(o_ref.dtype)


def _choose_batch_tile(batch, d_padded, itemsize, target_bytes=24 << 20):
    """Largest batch tile that keeps the double-buffered plan well under VMEM.

    Per row: 2x in tile + 2x out tile (io dtype, double-buffered) plus the
    f32 x0/xl working set. Capped at 1024 rows (diminishing returns past that
    and it keeps well inside v7x's 64 MiB physical VMEM).
    """
    per_row = d_padded * (4 * itemsize + 2 * 4)
    tb = target_bytes // max(per_row, 1)
    tb = int(min(tb, 1024))
    tb = max(8, (tb // 8) * 8)
    return min(tb, _round_up(batch, 8))


def crossnet_forward(x, kernels, biases, *, batch_tile=None):
    """x: (B, D); kernels/biases: (L, D). Returns (B, D)."""
    B, D = x.shape
    L = kernels.shape[0]
    itemsize = jnp.dtype(x.dtype).itemsize

    # Lane-dense feature axis: pad D to a multiple of 128 with zeros
    # (zero weight/bias/x lanes cannot contaminate the row dot).
    Dp = _round_up(D, 128)
    if Dp != D:
        x = jnp.pad(x, ((0, 0), (0, Dp - D)))
        kernels = jnp.pad(kernels, ((0, 0), (0, Dp - D)))
        biases = jnp.pad(biases, ((0, 0), (0, Dp - D)))

    # Batch tiling (the only axis that may be tiled: the dot reduces over D).
    if batch_tile is None:
        batch_tile = _choose_batch_tile(B, Dp, itemsize)
    Bp = _round_up(B, batch_tile)
    if Bp != B:
        x = jnp.pad(x, ((0, Bp - B), (0, 0)))

    grid = (Bp // batch_tile,)
    kernel = functools.partial(_crossnet_kernel, layer_num=L)

    out = pl.pallas_call(
        kernel,
        out_shape=jax.ShapeDtypeStruct((Bp, Dp), x.dtype),
        grid_spec=pltpu.PrefetchScalarGridSpec(
            num_scalar_prefetch=0,
            grid=grid,
            in_specs=[
                pl.BlockSpec((batch_tile, Dp), lambda i: (i, 0)),
                pl.BlockSpec((L, Dp), lambda i: (0, 0)),   # resident weights
                pl.BlockSpec((L, Dp), lambda i: (0, 0)),   # resident biases
            ],
            out_specs=pl.BlockSpec((batch_tile, Dp), lambda i: (i, 0)),
        ),
        compiler_params=pltpu.CompilerParams(
            dimension_semantics=("parallel",),        # shard batch across TCs
            vmem_limit_bytes=48 << 20,                # safe on v5e/v6e/v7x
        ),
        cost_estimate=pl.CostEstimate(
            flops=5 * L * Bp * Dp,
            transcendentals=0,
            bytes_accessed=(2 * Bp * Dp + 2 * L * Dp) * itemsize,
        ),
    )(x, kernels, biases)

    return out[:B, :D]


def init_crossnet_params(key, input_feature_num, layer_num=2, dtype=jnp.float32):
    """xavier-normal kernels (torch shape (D,1) -> stored (L,D)), zero biases."""
    # torch xavier_normal_ on (D, 1): fan_in = 1, fan_out = D
    std = (2.0 / (input_feature_num + 1)) ** 0.5
    kernels = std * jax.random.normal(key, (layer_num, input_feature_num), dtype=dtype)
    biases = jnp.zeros((layer_num, input_feature_num), dtype=dtype)
    return kernels, biases


def crossnet_reference(x, kernels, biases):
    """Pure-JAX reference of the PyTorch forward."""
    x0 = x.astype(jnp.float32)
    xl = x0
    for i in range(kernels.shape[0]):
        row_dot = xl @ kernels[i][:, None]            # (B, 1) == torch.mm(x_l, kernel)
        xl = x0 * row_dot + biases[i][None, :] + xl
    return xl.astype(x.dtype)


if __name__ == "__main__":
    key = jax.random.PRNGKey(0)
    k_x, k_w = jax.random.split(key)

    batch = 8
    units = 32          # input_feature_num (lane-padded to 128 internally)
    layer_num = 2

    x = jax.random.normal(k_x, (batch, units), dtype=jnp.float32)
    kernels, biases = init_crossnet_params(k_w, units, layer_num=layer_num)

    out = crossnet_forward(x, kernels, biases)
    out = jax.block_until_ready(out)

    ref = crossnet_reference(x, kernels, biases)
    assert out.shape == (batch, units)
    assert jnp.allclose(out, ref, atol=1e-5, rtol=1e-5), "Pallas output mismatch vs reference"

    print("KERNEL_OK")
</pallas_src>

<mosaic_0001>
module attributes {stable_mosaic.version = 11 : i64} {
  func.func @_crossnet_kernel(%arg0: i32, %arg1: memref<8x128xf32, #tpu.memory_space<vmem>>, %arg2: memref<2x128xf32, #tpu.memory_space<vmem>>, %arg3: memref<2x128xf32, #tpu.memory_space<vmem>>, %arg4: memref<8x128xf32, #tpu.memory_space<vmem>>) attributes {dimension_semantics = [#tpu.dimension_semantics<parallel>], iteration_bounds = array<i64: 1>, scalar_prefetch = 0 : i64, scratch_operands = 0 : i64, tpu.core_type = #tpu.core_type<tc>, window_params = [{transform_indices = @transform_0, window_bounds = array<i64: 8, 128>}, {pipeline_mode = #tpu.pipeline_mode<synchronous>, transform_indices = @transform_1, window_bounds = array<i64: 2, 128>}, {pipeline_mode = #tpu.pipeline_mode<synchronous>, transform_indices = @transform_2, window_bounds = array<i64: 2, 128>}, {transform_indices = @transform_3, window_bounds = array<i64: 8, 128>}]} {
    %c0 = arith.constant 0 : index
    %c0_0 = arith.constant 0 : index
    %0 = vector.load %arg1[%c0, %c0_0] : memref<8x128xf32, #tpu.memory_space<vmem>>, vector<8x128xf32>
    %c0_1 = arith.constant 0 : index
    %c0_2 = arith.constant 0 : index
    %1 = vector.load %arg2[%c0_1, %c0_2] : memref<2x128xf32, #tpu.memory_space<vmem>>, vector<1x128xf32>
    %2 = vector.shape_cast %1 : vector<1x128xf32> to vector<128xf32>
    %c0_3 = arith.constant 0 : index
    %c0_4 = arith.constant 0 : index
    %3 = vector.load %arg3[%c0_3, %c0_4] : memref<2x128xf32, #tpu.memory_space<vmem>>, vector<1x128xf32>
    %4 = vector.shape_cast %3 : vector<1x128xf32> to vector<128xf32>
    %5 = vector.shape_cast %2 : vector<128xf32> to vector<1x128xf32>
    %6 = vector.broadcast %5 : vector<1x128xf32> to vector<8x128xf32>
    %7 = arith.mulf %0, %6 : vector<8x128xf32>
    %cst = arith.constant dense<0.000000e+00> : vector<8xf32>
    %8 = vector.multi_reduction <add>, %7, %cst [1] : vector<8x128xf32> to vector<8xf32>
    %9 = vector.shape_cast %8 : vector<8xf32> to vector<8x1xf32>
    %10 = vector.broadcast %9 : vector<8x1xf32> to vector<8x128xf32>
    %11 = arith.mulf %0, %10 : vector<8x128xf32>
    %12 = vector.shape_cast %4 : vector<128xf32> to vector<1x128xf32>
    %13 = vector.broadcast %12 : vector<1x128xf32> to vector<8x128xf32>
    %14 = arith.addf %11, %13 : vector<8x128xf32>
    %15 = arith.addf %14, %0 : vector<8x128xf32>
    %c1 = arith.constant 1 : index
    %c0_5 = arith.constant 0 : index
    %16 = vector.load %arg2[%c1, %c0_5] : memref<2x128xf32, #tpu.memory_space<vmem>>, vector<1x128xf32>
    %17 = vector.shape_cast %16 : vector<1x128xf32> to vector<128xf32>
    %c1_6 = arith.constant 1 : index
    %c0_7 = arith.constant 0 : index
    %18 = vector.load %arg3[%c1_6, %c0_7] : memref<2x128xf32, #tpu.memory_space<vmem>>, vector<1x128xf32>
    %19 = vector.shape_cast %18 : vector<1x128xf32> to vector<128xf32>
    %20 = vector.shape_cast %17 : vector<128xf32> to vector<1x128xf32>
    %21 = vector.broadcast %20 : vector<1x128xf32> to vector<8x128xf32>
    %22 = arith.mulf %15, %21 : vector<8x128xf32>
    %cst_8 = arith.constant dense<0.000000e+00> : vector<8xf32>
    %23 = vector.multi_reduction <add>, %22, %cst_8 [1] : vector<8x128xf32> to vector<8xf32>
    %24 = vector.shape_cast %23 : vector<8xf32> to vector<8x1xf32>
    %25 = vector.broadcast %24 : vector<8x1xf32> to vector<8x128xf32>
    %26 = arith.mulf %0, %25 : vector<8x128xf32>
    %27 = vector.shape_cast %19 : vector<128xf32> to vector<1x128xf32>
    %28 = vector.broadcast %27 : vector<1x128xf32> to vector<8x128xf32>
    %29 = arith.addf %26, %28 : vector<8x128xf32>
    %30 = arith.addf %29, %15 : vector<8x128xf32>
    %c0_9 = arith.constant 0 : index
    %c0_10 = arith.constant 0 : index
    %31 = vector.load %arg4[%c0_9, %c0_10] : memref<8x128xf32, #tpu.memory_space<vmem>>, vector<8x128xf32>
    tpu.vector_store %arg4[%c0_9, %c0_10], %30 {strides = array<i32>} : memref<8x128xf32, #tpu.memory_space<vmem>>, vector<8x128xf32>,
    return
  }
  func.func @transform_0(%arg0: i32) -> (i32, i32) {
    %c0_i32 = arith.constant 0 : i32
    %c0_i32_0 = arith.constant 0 : i32
    return %arg0, %c0_i32 : i32, i32
  }
  func.func @transform_1(%arg0: i32) -> (i32, i32) {
    %c0_i32 = arith.constant 0 : i32
    %c0_i32_0 = arith.constant 0 : i32
    %c0_i32_1 = arith.constant 0 : i32
    return %c0_i32, %c0_i32_0 : i32, i32
  }
  func.func @transform_2(%arg0: i32) -> (i32, i32) {
    %c0_i32 = arith.constant 0 : i32
    %c0_i32_0 = arith.constant 0 : i32
    %c0_i32_1 = arith.constant 0 : i32
    return %c0_i32, %c0_i32_0 : i32, i32
  }
  func.func @transform_3(%arg0: i32) -> (i32, i32) {
    %c0_i32 = arith.constant 0 : i32
    %c0_i32_0 = arith.constant 0 : i32
    return %arg0, %c0_i32 : i32, i32
  }
}

</mosaic_0001>

<llo_original>
// kernel: tpu_custom_call.1
$region0: #{tpu_custom_call.1}
  #allocation0 [shape = 'u32[]', space=smem, size = 0x4, offset = 0x4, fixed_abs, tag = 'smem constant byte address 0x4 - core index']
  #allocation1 [shape = 'u32[144,128]{1,0:T(1,128)}', space=vmem, size = 0x12000, scoped, tag = 'internal scratch']
  %s0 = inlined_call_operand.hbm [shape: f32[8,128], index: 0, kind: input, shape index: {}]
  %s1 = inlined_call_operand.vmem [shape: f32[2,128], index: 1, kind: input, shape index: {}]
  %s2 = inlined_call_operand.vmem [shape: f32[2,128], index: 2, kind: input, shape index: {}]
  %s3 = inlined_call_operand.hbm [shape: f32[8,128], index: 3, kind: output, shape index: {}]
  %s4 = sld [smem:[#allocation0]]
  $region26: #{tpu_custom_call.1} parent=0
    _
  %s6 = ssub.s32 1, %s4
  %s7 = scalar_select 0, %s6, %s4
  $region1: #{tpu_custom_call.1} parent=0
    #allocation2 [shape = 'u8[4096]{0}', space=vmem, size = 0x1000, scoped, tag = 'input window, operand 0, single buffered']
    #allocation3 [shape = 's32[1]{0}', space=sflag, size = 0x4, scoped, tag = 'scoped memory for tpu_custom_call.1']
    #allocation4 [shape = 's32[1]{0}', space=sflag, size = 0x4, scoped, tag = 'scoped memory for tpu_custom_call.1']
    #allocation5 [shape = 'u8[4096]{0}', space=vmem, size = 0x1000, scoped, tag = 'output window, operand 0, single buffered']
    %8 = vsyncpa [#allocation3], 0
    %9 = vsyncpa [#allocation4], 0
    // Predicated region
    $region2: #{tpu_custom_call.1} parent=1 // pred_check
      _
    $region3: #{tpu_custom_call.1} parent=1 // pred_check_branch
      %11 = sbr.rel (0) target = $region5
    $region4: #{tpu_custom_call.1} parent=1 // pred_region
      %s13 = ssub.s32 128, 128
      %14 = vsyncadd [#allocation3], %s13
      %s16 = sshll.u32 [#allocation2], 4
      %s17 = int_to_ptr.vmem [resolvable:$true] %s16
      %19 = dma.hbm_to_vmem [thread:$0]  %s0, 128, %s17, [#allocation3]
    $region5: #{tpu_custom_call.1} parent=1 // pred_fallthru
      _
    // Predicated region
    $region6: #{tpu_custom_call.1} parent=1 // pred_check
      _
    $region7: #{tpu_custom_call.1} parent=1 // pred_check_branch
      %21 = sbr.rel (0) target = $region9
    $region8: #{tpu_custom_call.1} parent=1 // pred_region
      _
    $region9: #{tpu_custom_call.1} parent=1 // pred_fallthru
      _
    // Predicated region
    $region10: #{tpu_custom_call.1} parent=1 // pred_check
      _
    $region11: #{tpu_custom_call.1} parent=1 // pred_check_branch
      %23 = sbr.rel (0) target = $region13
    $region12: #{tpu_custom_call.1} parent=1 // pred_region
      _
    $region13: #{tpu_custom_call.1} parent=1 // pred_fallthru
      _
    // Predicated region
    $region14: #{tpu_custom_call.1} parent=1 // pred_check
      _
    $region15: #{tpu_custom_call.1} parent=1 // pred_check_branch
      %25 = sbr.rel (0) target = $region17
    $region16: #{tpu_custom_call.1} parent=1 // pred_region
      %26 = dma.done [#allocation3], 128
    $region17: #{tpu_custom_call.1} parent=1 // pred_fallthru
      _
    %v27 = vld [vmem:[#allocation2] sm:$0xff]
    %v28 = vld [vmem:[%s1] sm:$0x1]
    %v29 = vld [vmem:[%s2] sm:$0x1]
    %v30 = vlaneseq
    %v31 = vshrl.u32 %v30, 7
    %v32 = vsub.s32 0, %v31
    %v33 = vrot.slane %v28, %v32
    %v34 = vmul.f32 %v27, %v33
    %35 = vadd.xlane.f32.xlu0 %v34
    %v36 = vpop.xlane.xlu0 %35
    %v37 = vmul.f32 %v27, %v36
    %v38 = vlaneseq
    %v39 = vshrl.u32 %v38, 7
    %v40 = vsub.s32 0, %v39
    %v41 = vrot.slane %v29, %v40
    %v42 = vadd.f32 %v37, %v41
    %v43 = vadd.f32 %v42, %v27
    %v44 = vld [vmem:[%s1 + $0x1] sm:$0x1]
    %v45 = vld [vmem:[%s2 + $0x1] sm:$0x1]
    %v46 = vlaneseq
    %v47 = vshrl.u32 %v46, 7
    %v48 = vsub.s32 0, %v47
    %v49 = vrot.slane %v44, %v48
    %v50 = vmul.f32 %v43, %v49
    %51 = vadd.xlane.f32.xlu0 %v50
    %v52 = vpop.xlane.xlu0 %51
    %v53 = vmul.f32 %v27, %v52
    %v54 = vlaneseq
    %v55 = vshrl.u32 %v54, 7
    %v56 = vsub.s32 0, %v55
    %v57 = vrot.slane %v45, %v56
    %v58 = vadd.f32 %v53, %v57
    %v59 = vadd.f32 %v58, %v43
    %60 = vst [vmem:[#allocation5] sm:$0xff] %v59
    // Predicated region
    $region18: #{tpu_custom_call.1} parent=1 // pred_check
      _
    $region19: #{tpu_custom_call.1} parent=1 // pred_check_branch
      %62 = sbr.rel (0) target = $region21
    $region20: #{tpu_custom_call.1} parent=1 // pred_region
      %s64 = ssub.s32 128, 128
      %65 = vsyncadd [#allocation4], %s64
      %s67 = sshll.u32 [#allocation5], 4
      %s68 = int_to_ptr.vmem [resolvable:$true] %s67
      %70 = dma.vmem_to_hbm [thread:$0]  %s68, 128, %s3, [#allocation4]
    $region21: #{tpu_custom_call.1} parent=1 // pred_fallthru
      _
    // Predicated region
    $region22: #{tpu_custom_call.1} parent=1 // pred_check
      _
    $region23: #{tpu_custom_call.1} parent=1 // pred_check_branch
      %72 = sbr.rel (0) target = $region25
    $region24: #{tpu_custom_call.1} parent=1 // pred_region
      %73 = dma.done [#allocation4], 128
    $region25: #{tpu_custom_call.1} parent=1 // pred_fallthru
      _
    %74 = vsyncpa [#allocation3], 1
    %75 = vsyncpa [#allocation4], 1

</llo_original>
